<compile_context>
chip_gen: v5e
topology: v5e:2x2
jax: 0.10.0
libtpu: 0.0.40
codegen_flags: <defaults>
</compile_context>

<pallas_src>
import jax
import jax.numpy as jnp
from jax.experimental import pallas as pl
from jax.experimental.pallas import tpu as pltpu


def _round_up(x, m):
    return ((x + m - 1) // m) * m


def _matmul_kernel(lhs_ref, rhs_ref, o_ref, acc_ref):
    k = pl.program_id(2)

    @pl.when(k == 0)
    def _():
        acc_ref[...] = jnp.zeros_like(acc_ref)

    acc_ref[...] += jnp.dot(lhs_ref[...], rhs_ref[...],
                            preferred_element_type=jnp.float32)

    @pl.when(k == pl.num_programs(2) - 1)
    def _():
        o_ref[...] = acc_ref[...].astype(o_ref.dtype)


def _matmul_bias_kernel(lhs_ref, rhs_ref, b_ref, o_ref, acc_ref):
    k = pl.program_id(2)

    @pl.when(k == 0)
    def _():
        acc_ref[...] = jnp.zeros_like(acc_ref)

    acc_ref[...] += jnp.dot(lhs_ref[...], rhs_ref[...],
                            preferred_element_type=jnp.float32)

    @pl.when(k == pl.num_programs(2) - 1)
    def _():
        # Per-output-row bias column, added once in the f32 epilogue.
        o_ref[...] = (acc_ref[...] + b_ref[...]).astype(o_ref.dtype)


def pallas_matmul(lhs, rhs, bias=None, *, out_dtype=jnp.float32,
                  tm=256, tn=256, tk=512):
    """out = lhs @ rhs (+ bias[:, None]); tiled Pallas matmul, f32 accumulation."""
    M, K = lhs.shape
    K2, N = rhs.shape
    assert K == K2

    # Clamp tiles so small problems still get (8,128)-aligned, lane-dense blocks.
    tm = min(tm, _round_up(M, 128))
    tn = min(tn, _round_up(N, 128))
    tk = min(tk, _round_up(K, 128))
    Mp, Np, Kp = _round_up(M, tm), _round_up(N, tn), _round_up(K, tk)

    # Zero padding: contributes nothing to the contraction; sliced off at the end.
    lhs_p = jnp.zeros((Mp, Kp), lhs.dtype).at[:M, :K].set(lhs)
    rhs_p = jnp.zeros((Kp, Np), rhs.dtype).at[:K, :N].set(rhs)

    grid = (Mp // tm, Np // tn, Kp // tk)

    in_specs = [
        pl.BlockSpec((tm, tk), lambda i, j, k: (i, k)),   # lhs
        pl.BlockSpec((tk, tn), lambda i, j, k: (k, j)),   # rhs
    ]
    operands = [lhs_p, rhs_p]
    if bias is not None:
        b_p = jnp.zeros((Mp, 1), jnp.float32).at[:M, 0].set(
            bias.reshape(-1).astype(jnp.float32))
        in_specs.append(pl.BlockSpec((tm, 1), lambda i, j, k: (i, 0)))
        operands.append(b_p)
        kernel = _matmul_bias_kernel
    else:
        kernel = _matmul_kernel

    out_itemsize = jnp.zeros((), out_dtype).dtype.itemsize
    cost = pl.CostEstimate(
        flops=2 * Mp * Kp * Np,
        transcendentals=0,
        bytes_accessed=(Mp * Kp * lhs_p.dtype.itemsize
                        + Kp * Np * rhs_p.dtype.itemsize
                        + Mp * Np * out_itemsize),
    )

    out_p = pl.pallas_call(
        kernel,
        out_shape=jax.ShapeDtypeStruct((Mp, Np), out_dtype),
        grid_spec=pltpu.PrefetchScalarGridSpec(
            num_scalar_prefetch=0,
            grid=grid,
            in_specs=in_specs,
            out_specs=pl.BlockSpec((tm, tn), lambda i, j, k: (i, j)),
            scratch_shapes=[pltpu.VMEM((tm, tn), jnp.float32)],
        ),
        compiler_params=pltpu.CompilerParams(
            dimension_semantics=("parallel", "parallel", "arbitrary"),
            vmem_limit_bytes=32 * 1024 * 1024,
        ),
        cost_estimate=cost,
    )(*operands)

    return out_p[:M, :N]


def gcn_custom_layer(X, A, W, bias=None):
    """Pallas implementation of GCNCustomLayer.forward.

    X: (N, M), A: (N, N) adjacency (dense; zero entries == sparse COO math),
    W: (N, N), bias: (N,) or None.  Returns (N, M) float32.
    """
    N, M = X.shape
    assert A.shape == (N, N) and W.shape == (N, N)

    # bf16 MXU inputs, f32 accumulation (3x MXU throughput on v6e/v7x,
    # half the VMEM footprint). Numerically adequate for GCN aggregation.
    A_b = A.astype(jnp.bfloat16)
    X_b = X.astype(jnp.bfloat16)
    W_b = W.astype(jnp.bfloat16)

    # X1 = A @ X  (aggregation); keep intermediate bf16 to feed the MXU again.
    X1 = pallas_matmul(A_b, X_b, out_dtype=jnp.bfloat16)
    # out = W @ X1 (+ bias per output row), bias added in the f32 epilogue.
    out = pallas_matmul(W_b, X1, bias=bias, out_dtype=jnp.float32)
    return out


if __name__ == "__main__":
    key = jax.random.PRNGKey(0)
    k_w, k_x, k_a, k_m = jax.random.split(key, 4)

    in_features = 32   # N == in_features (required by W @ (A @ X))
    M = 16             # number of feature columns in X

    # Deterministic parameter init (mirrors nn.Parameter + xavier_uniform_).
    bound = (6.0 / (in_features + in_features)) ** 0.5
    W = jax.random.uniform(k_w, (in_features, in_features),
                           minval=-bound, maxval=bound, dtype=jnp.float32)
    has_bias = True
    bias = jnp.zeros((in_features,), dtype=jnp.float32)  # init.zeros_

    # Inputs.
    X = jax.random.normal(k_x, (in_features, M), dtype=jnp.float32)
    # Sparse-ish adjacency: random values, ~70% zeroed out (dense math ==
    # torch.sparse.mm on the COO form of the same matrix).
    a_vals = jax.random.normal(k_a, (in_features, in_features), dtype=jnp.float32)
    a_mask = jax.random.uniform(k_m, (in_features, in_features)) < 0.3
    A = jnp.where(a_mask, a_vals, 0.0)

    out = gcn_custom_layer(X, A, W, bias if has_bias else None)
    out = jax.block_until_ready(out)

    # Reference check in f32.
    ref = W @ (A @ X)
    if has_bias:
        ref = (ref.T + bias).T
    assert out.shape == (in_features, M)
    # bf16 MXU inputs with f32 accumulation -> loosened tolerance vs f32 ref.
    assert jnp.allclose(out, ref, atol=5e-2, rtol=5e-2), float(
        jnp.max(jnp.abs(out - ref)))

    print("KERNEL_OK")
</pallas_src>

<mosaic_0001>
module attributes {stable_mosaic.version = 11 : i64} {
  func.func @_matmul_kernel(%arg0: i32, %arg1: i32, %arg2: i32, %arg3: memref<128x128xbf16, #tpu.memory_space<vmem>>, %arg4: memref<128x128xbf16, #tpu.memory_space<vmem>>, %arg5: memref<128x128xbf16, #tpu.memory_space<vmem>>, %arg6: memref<128x128xf32, #tpu.memory_space<vmem>>) attributes {dimension_semantics = [#tpu.dimension_semantics<parallel>, #tpu.dimension_semantics<parallel>, #tpu.dimension_semantics<arbitrary>], iteration_bounds = array<i64: 1, 1, 1>, scalar_prefetch = 0 : i64, scratch_operands = 1 : i64, tpu.core_type = #tpu.core_type<tc>, window_params = [{transform_indices = @transform_0, window_bounds = array<i64: 128, 128>}, {transform_indices = @transform_1, window_bounds = array<i64: 128, 128>}, {transform_indices = @transform_2, window_bounds = array<i64: 128, 128>}]} {
    %c0_i32 = arith.constant 0 : i32
    %0 = arith.cmpi eq, %arg2, %c0_i32 : i32
    %1 = arith.extui %0 : i1 to i32
    %c0_i32_0 = arith.constant 0 : i32
    %2 = arith.cmpi ne, %1, %c0_i32_0 : i32
    scf.if %2 {
      %cst_10 = arith.constant 0.000000e+00 : f32
      %12 = vector.broadcast %cst_10 : f32 to vector<128x128xf32>
      %c0_11 = arith.constant 0 : index
      %c0_12 = arith.constant 0 : index
      %13 = vector.load %arg6[%c0_11, %c0_12] : memref<128x128xf32, #tpu.memory_space<vmem>>, vector<128x128xf32>
      tpu.vector_store %arg6[%c0_11, %c0_12], %12 {strides = array<i32>} : memref<128x128xf32, #tpu.memory_space<vmem>>, vector<128x128xf32>,
    } else {
    }
    %c0 = arith.constant 0 : index
    %c0_1 = arith.constant 0 : index
    %3 = vector.load %arg6[%c0, %c0_1] : memref<128x128xf32, #tpu.memory_space<vmem>>, vector<128x128xf32>
    %c0_2 = arith.constant 0 : index
    %c0_3 = arith.constant 0 : index
    %4 = vector.load %arg3[%c0_2, %c0_3] : memref<128x128xbf16, #tpu.memory_space<vmem>>, vector<128x128xbf16>
    %c0_4 = arith.constant 0 : index
    %c0_5 = arith.constant 0 : index
    %5 = vector.load %arg4[%c0_4, %c0_5] : memref<128x128xbf16, #tpu.memory_space<vmem>>, vector<128x128xbf16>
    %cst = arith.constant dense<0.000000e+00> : vector<128x128xf32>
    %6 = tpu.matmul %4, %5, %cst {dimension_numbers = #tpu.dot_dimension_numbers<[1], [0], [0], [1], [0, 0, 1, 1], [], []>} : vector<128x128xbf16>, vector<128x128xbf16>, vector<128x128xf32> -> vector<128x128xf32>
    %7 = arith.addf %3, %6 : vector<128x128xf32>
    %c0_6 = arith.constant 0 : index
    %c0_7 = arith.constant 0 : index
    %8 = vector.load %arg6[%c0_6, %c0_7] : memref<128x128xf32, #tpu.memory_space<vmem>>, vector<128x128xf32>
    tpu.vector_store %arg6[%c0_6, %c0_7], %7 {strides = array<i32>} : memref<128x128xf32, #tpu.memory_space<vmem>>, vector<128x128xf32>,
    %c0_i32_8 = arith.constant 0 : i32
    %9 = arith.cmpi eq, %arg2, %c0_i32_8 : i32
    %10 = arith.extui %9 : i1 to i32
    %c0_i32_9 = arith.constant 0 : i32
    %11 = arith.cmpi ne, %10, %c0_i32_9 : i32
    scf.if %11 {
      %c0_10 = arith.constant 0 : index
      %c0_11 = arith.constant 0 : index
      %12 = vector.load %arg6[%c0_10, %c0_11] : memref<128x128xf32, #tpu.memory_space<vmem>>, vector<128x128xf32>
      %13 = arith.truncf %12 : vector<128x128xf32> to vector<128x128xbf16>
      %c0_12 = arith.constant 0 : index
      %c0_13 = arith.constant 0 : index
      %14 = vector.load %arg5[%c0_12, %c0_13] : memref<128x128xbf16, #tpu.memory_space<vmem>>, vector<128x128xbf16>
      tpu.vector_store %arg5[%c0_12, %c0_13], %13 {strides = array<i32>} : memref<128x128xbf16, #tpu.memory_space<vmem>>, vector<128x128xbf16>,
    } else {
    }
    return
  }
  func.func @transform_0(%arg0: i32, %arg1: i32, %arg2: i32) -> (i32, i32) {
    %c0_i32 = arith.constant 0 : i32
    return %arg0, %arg2 : i32, i32
  }
  func.func @transform_1(%arg0: i32, %arg1: i32, %arg2: i32) -> (i32, i32) {
    %c0_i32 = arith.constant 0 : i32
    return %arg2, %arg1 : i32, i32
  }
  func.func @transform_2(%arg0: i32, %arg1: i32, %arg2: i32) -> (i32, i32) {
    %c0_i32 = arith.constant 0 : i32
    return %arg0, %arg1 : i32, i32
  }
}

</mosaic_0001>

<llo_original>
// kernel: tpu_custom_call.1
$region0: #{tpu_custom_call.1}
  #allocation0 [shape = 'u32[]', space=smem, size = 0x4, offset = 0x4, fixed_abs, tag = 'smem constant byte address 0x4 - core index']
  #allocation1 [shape = 'u32[72,128]{1,0:T(1,128)}', space=vmem, size = 0x9000, scoped, tag = 'internal scratch']
  #allocation2 [shape = 'f32[128,128]{1,0:T(8,128)}', space=vmem, size = 0x10000, scoped, tag = 'scratch operand']
  %s0 = inlined_call_operand.hbm [shape: bf16[128,128], index: 0, kind: input, shape index: {}]
  %s1 = inlined_call_operand.hbm [shape: bf16[128,128], index: 1, kind: input, shape index: {}]
  %s2 = inlined_call_operand.hbm [shape: bf16[128,128], index: 2, kind: output, shape index: {}]
  %s3 = sld [smem:[#allocation0]]
  $region34: #{tpu_custom_call.1} parent=0
    _
  %s5 = ssub.s32 1, %s3
  %s6 = scalar_select 0, %s5, %s3
  $region1: #{tpu_custom_call.1} parent=0
    #allocation3 [shape = 'u8[32768]{0}', space=vmem, size = 0x8000, scoped, tag = 'input window, operand 0, single buffered']
    #allocation4 [shape = 's32[1]{0}', space=sflag, size = 0x4, scoped, tag = 'scoped memory for tpu_custom_call.1']
    #allocation5 [shape = 's32[1]{0}', space=sflag, size = 0x4, scoped, tag = 'scoped memory for tpu_custom_call.1']
    #allocation6 [shape = 'u8[32768]{0}', space=vmem, size = 0x8000, scoped, tag = 'input window, operand 1, single buffered']
    #allocation7 [shape = 's32[1]{0}', space=sflag, size = 0x4, scoped, tag = 'scoped memory for tpu_custom_call.1']
    #allocation8 [shape = 'u8[32768]{0}', space=vmem, size = 0x8000, scoped, tag = 'output window, operand 0, single buffered']
    %7 = vsyncpa [#allocation4], 0
    %8 = vsyncpa [#allocation7], 0
    %9 = vsyncpa [#allocation5], 0
    // Predicated region
    $region2: #{tpu_custom_call.1} parent=1 // pred_check
      _
    $region3: #{tpu_custom_call.1} parent=1 // pred_check_branch
      %11 = sbr.rel (0) target = $region5
    $region4: #{tpu_custom_call.1} parent=1 // pred_region
      %13 = vsyncadd [#allocation4], 0
      %s14 = sshll.u32 %s0, 4
      %s15 = int_to_ptr.hbm [resolvable:$true] %s14
      %s16 = sshll.u32 [#allocation3], 4
      %s17 = int_to_ptr.vmem [resolvable:$true] %s16
      %22 = dma.hbm_to_vmem [thread:$0]  %s15, 1024, %s17, [#allocation4], 64, 64, 4
    $region5: #{tpu_custom_call.1} parent=1 // pred_fallthru
      _
    // Predicated region
    $region6: #{tpu_custom_call.1} parent=1 // pred_check
      _
    $region7: #{tpu_custom_call.1} parent=1 // pred_check_branch
      %24 = sbr.rel (0) target = $region9
    $region8: #{tpu_custom_call.1} parent=1 // pred_region
      %26 = vsyncadd [#allocation7], 0
      %s27 = sshll.u32 %s1, 4
      %s28 = int_to_ptr.hbm [resolvable:$true] %s27
      %s29 = sshll.u32 [#allocation6], 4
      %s30 = int_to_ptr.vmem [resolvable:$true] %s29
      %35 = dma.hbm_to_vmem [thread:$0]  %s28, 1024, %s30, [#allocation7], 64, 64, 4
    $region9: #{tpu_custom_call.1} parent=1 // pred_fallthru
      _
    // Predicated region
    $region10: #{tpu_custom_call.1} parent=1 // pred_check
      _
    $region11: #{tpu_custom_call.1} parent=1 // pred_check_branch
      %37 = sbr.rel (0) target = $region13
    $region12: #{tpu_custom_call.1} parent=1 // pred_region
      %39 = dma.done [#allocation4], 1024
    $region13: #{tpu_custom_call.1} parent=1 // pred_fallthru
      _
    // Predicated region
    $region14: #{tpu_custom_call.1} parent=1 // pred_check
      _
    $region15: #{tpu_custom_call.1} parent=1 // pred_check_branch
      %41 = sbr.rel (0) target = $region17
    $region16: #{tpu_custom_call.1} parent=1 // pred_region
      %43 = dma.done [#allocation7], 1024
    $region17: #{tpu_custom_call.1} parent=1 // pred_fallthru
      _
    %p44 = scmp.eq.s32.totalorder 0, 0
    // Predicated region
    $region18: #{tpu_custom_call.1} parent=1 // pred_check
      %p45 = pneg %p44
    $region19: #{tpu_custom_call.1} parent=1 // pred_check_branch
      %47 = sbr.rel (%p45) target = $region21
    $region20: #{tpu_custom_call.1} parent=1 // pred_region
      %48 = vst [vmem:[#allocation2] sm:$0xff] 0.0
      %49 = vst [vmem:[#allocation2 + $0x8] sm:$0xff] 0.0
      %50 = vst [vmem:[#allocation2 + $0x10] sm:$0xff] 0.0
      %51 = vst [vmem:[#allocation2 + $0x18] sm:$0xff] 0.0
      %52 = vst [vmem:[#allocation2 + $0x20] sm:$0xff] 0.0
      %53 = vst [vmem:[#allocation2 + $0x28] sm:$0xff] 0.0
      %54 = vst [vmem:[#allocation2 + $0x30] sm:$0xff] 0.0
      %55 = vst [vmem:[#allocation2 + $0x38] sm:$0xff] 0.0
      %56 = vst [vmem:[#allocation2 + $0x40] sm:$0xff] 0.0
      %57 = vst [vmem:[#allocation2 + $0x48] sm:$0xff] 0.0
      %58 = vst [vmem:[#allocation2 + $0x50] sm:$0xff] 0.0
      %59 = vst [vmem:[#allocation2 + $0x58] sm:$0xff] 0.0
      %60 = vst [vmem:[#allocation2 + $0x60] sm:$0xff] 0.0
      %61 = vst [vmem:[#allocation2 + $0x68] sm:$0xff] 0.0
      %62 = vst [vmem:[#allocation2 + $0x70] sm:$0xff] 0.0
      %63 = vst [vmem:[#allocation2 + $0x78] sm:$0xff] 0.0
    $region21: #{tpu_custom_call.1} parent=1 // pred_fallthru
      _
    %v64 = vld [vmem:[#allocation2] sm:$0xff]
    %v65 = vld [vmem:[#allocation2 + $0x8] sm:$0xff]
    %v66 = vld [vmem:[#allocation2 + $0x10] sm:$0xff]
    %v67 = vld [vmem:[#allocation2 + $0x18] sm:$0xff]
    %v68 = vld [vmem:[#allocation2 + $0x20] sm:$0xff]
    %v69 = vld [vmem:[#allocation2 + $0x28] sm:$0xff]
    %v70 = vld [vmem:[#allocation2 + $0x30] sm:$0xff]
    %v71 = vld [vmem:[#allocation2 + $0x38] sm:$0xff]
    %v72 = vld [vmem:[#allocation2 + $0x40] sm:$0xff]
    %v73 = vld [vmem:[#allocation2 + $0x48] sm:$0xff]
    %v74 = vld [vmem:[#allocation2 + $0x50] sm:$0xff]
    %v75 = vld [vmem:[#allocation2 + $0x58] sm:$0xff]
    %v76 = vld [vmem:[#allocation2 + $0x60] sm:$0xff]
    %v77 = vld [vmem:[#allocation2 + $0x68] sm:$0xff]
    %v78 = vld [vmem:[#allocation2 + $0x70] sm:$0xff]
    %v79 = vld [vmem:[#allocation2 + $0x78] sm:$0xff]
    %v80 = vld [vmem:[#allocation3] sm:$0xf]
    %v81 = vld [vmem:[#allocation3 + $0x4] sm:$0xf]
    %v82 = vld [vmem:[#allocation3 + $0x8] sm:$0xf]
    %v83 = vld [vmem:[#allocation3 + $0xc] sm:$0xf]
    %v84 = vld [vmem:[#allocation3 + $0x10] sm:$0xf]
    %v85 = vld [vmem:[#allocation3 + $0x14] sm:$0xf]
    %v86 = vld [vmem:[#allocation3 + $0x18] sm:$0xf]
    %v87 = vld [vmem:[#allocation3 + $0x1c] sm:$0xf]
    %v88 = vld [vmem:[#allocation3 + $0x20] sm:$0xf]
    %v89 = vld [vmem:[#allocation3 + $0x24] sm:$0xf]
    %v90 = vld [vmem:[#allocation3 + $0x28] sm:$0xf]
    %v91 = vld [vmem:[#allocation3 + $0x2c] sm:$0xf]
    %v92 = vld [vmem:[#allocation3 + $0x30] sm:$0xf]
    %v93 = vld [vmem:[#allocation3 + $0x34] sm:$0xf]
    %v94 = vld [vmem:[#allocation3 + $0x38] sm:$0xf]
    %v95 = vld [vmem:[#allocation3 + $0x3c] sm:$0xf]
    %v96 = vld [vmem:[#allocation6] sm:$0xf]
    %v97 = vld [vmem:[#allocation6 + $0x4] sm:$0xf]
    %v98 = vld [vmem:[#allocation6 + $0x8] sm:$0xf]
    %v99 = vld [vmem:[#allocation6 + $0xc] sm:$0xf]
    %v100 = vld [vmem:[#allocation6 + $0x10] sm:$0xf]
    %v101 = vld [vmem:[#allocation6 + $0x14] sm:$0xf]
    %v102 = vld [vmem:[#allocation6 + $0x18] sm:$0xf]
    %v103 = vld [vmem:[#allocation6 + $0x1c] sm:$0xf]
    %v104 = vld [vmem:[#allocation6 + $0x20] sm:$0xf]
    %v105 = vld [vmem:[#allocation6 + $0x24] sm:$0xf]
    %v106 = vld [vmem:[#allocation6 + $0x28] sm:$0xf]
    %v107 = vld [vmem:[#allocation6 + $0x2c] sm:$0xf]
    %v108 = vld [vmem:[#allocation6 + $0x30] sm:$0xf]
    %v109 = vld [vmem:[#allocation6 + $0x34] sm:$0xf]
    %v110 = vld [vmem:[#allocation6 + $0x38] sm:$0xf]
    %v111 = vld [vmem:[#allocation6 + $0x3c] sm:$0xf]
    %v128 = vunpack.c.l.b16 %v80
    %v129 = vunpack.c.l.b16 %v81
    %v130 = vunpack.c.l.b16 %v82
    %v131 = vunpack.c.l.b16 %v83
    %v132 = vunpack.c.l.b16 %v84
    %v133 = vunpack.c.l.b16 %v85
    %v134 = vunpack.c.l.b16 %v86
    %v135 = vunpack.c.l.b16 %v87
    %v136 = vunpack.c.l.b16 %v88
    %v137 = vunpack.c.l.b16 %v89
    %v138 = vunpack.c.l.b16 %v90
    %v139 = vunpack.c.l.b16 %v91
    %v140 = vunpack.c.l.b16 %v92
    %v141 = vunpack.c.l.b16 %v93
    %v142 = vunpack.c.l.b16 %v94
    %v143 = vunpack.c.l.b16 %v95
    %v144 = vpack.c.b16 %v129, %v128
    %v145 = vpack.c.b16 %v131, %v130
    %v146 = vpack.c.b16 %v133, %v132
    %v147 = vpack.c.b16 %v135, %v134
    %v148 = vpack.c.b16 %v137, %v136
    %v149 = vpack.c.b16 %v139, %v138
    %v150 = vpack.c.b16 %v141, %v140
    %v151 = vpack.c.b16 %v143, %v142
    %v176 = vunpack.c.l.b16 %v96
    %v177 = vunpack.c.l.b16 %v97
    %v178 = vunpack.c.l.b16 %v98
    %v179 = vunpack.c.l.b16 %v99
    %v180 = vunpack.c.l.b16 %v100
    %v181 = vunpack.c.l.b16 %v101
    %v182 = vunpack.c.l.b16 %v102
    %v183 = vunpack.c.l.b16 %v103
    %v184 = vunpack.c.l.b16 %v104
    %v185 = vunpack.c.l.b16 %v105
    %v186 = vunpack.c.l.b16 %v106
    %v187 = vunpack.c.l.b16 %v107
    %v188 = vunpack.c.l.b16 %v108
    %v189 = vunpack.c.l.b16 %v109
    %v190 = vunpack.c.l.b16 %v110
    %v191 = vunpack.c.l.b16 %v111
    %v192 = vpack.c.b16 %v177, %v176
    %v193 = vpack.c.b16 %v179, %v178
    %v194 = vpack.c.b16 %v181, %v180
    %v195 = vpack.c.b16 %v183, %v182
    %v196 = vpack.c.b16 %v185, %v184
    %v197 = vpack.c.b16 %v187, %v186
    %v198 = vpack.c.b16 %v189, %v188
    %v199 = vpack.c.b16 %v191, %v190
    %208 = vmatpush.bf16.msra.mxu0 %v199
    %209 = vmatpush.bf16.msra.mxu0 %v198
    %210 = vmatpush.bf16.msra.mxu0 %v197
    %211 = vmatpush.bf16.msra.mxu0 %v196
    %212 = vmatpush.bf16.msra.mxu0 %v195
    %213 = vmatpush.bf16.msra.mxu0 %v194
    %214 = vmatpush.bf16.msra.mxu0 %v193
    %215 = vmatpush.bf16.msra.mxu0 %v192
    %216 = vmatmul.bf16.gmra.mxu0 %v144
    %v217 = vpop.f32.mrf.mxu0
    %v218 = vadd.f32 0.0, %v217
    %v219 = vpop.f32.mrf.mxu0
    %v220 = vadd.f32 0.0, %v219
    %221 = vmatmul.bf16.gmra.mxu0 %v145
    %v222 = vpop.f32.mrf.mxu0
    %v223 = vadd.f32 0.0, %v222
    %v224 = vpop.f32.mrf.mxu0
    %v225 = vadd.f32 0.0, %v224
    %226 = vmatmul.bf16.gmra.mxu0 %v146
    %v227 = vpop.f32.mrf.mxu0
    %v228 = vadd.f32 0.0, %v227
    %v229 = vpop.f32.mrf.mxu0
    %v230 = vadd.f32 0.0, %v229
    %231 = vmatmul.bf16.gmra.mxu0 %v147
    %v232 = vpop.f32.mrf.mxu0
    %v233 = vadd.f32 0.0, %v232
    %v234 = vpop.f32.mrf.mxu0
    %v235 = vadd.f32 0.0, %v234
    %236 = vmatmul.bf16.gmra.mxu0 %v148
    %v237 = vpop.f32.mrf.mxu0
    %v238 = vadd.f32 0.0, %v237
    %v239 = vpop.f32.mrf.mxu0
    %v240 = vadd.f32 0.0, %v239
    %241 = vmatmul.bf16.gmra.mxu0 %v149
    %v242 = vpop.f32.mrf.mxu0
    %v243 = vadd.f32 0.0, %v242
    %v244 = vpop.f32.mrf.mxu0
    %v245 = vadd.f32 0.0, %v244
    %246 = vmatmul.bf16.gmra.mxu0 %v150
    %v247 = vpop.f32.mrf.mxu0
    %v248 = vadd.f32 0.0, %v247
    %v249 = vpop.f32.mrf.mxu0
    %v250 = vadd.f32 0.0, %v249
    %251 = vmatmul.bf16.gmra.mxu0 %v151
    %v252 = vpop.f32.mrf.mxu0
    %v253 = vadd.f32 0.0, %v252
    %v254 = vpop.f32.mrf.mxu0
    %v255 = vadd.f32 0.0, %v254
    %256 = vdwg.mxu0
    %v257 = vadd.f32 %v64, %v218
    %v258 = vadd.f32 %v65, %v220
    %v259 = vadd.f32 %v66, %v223
    %v260 = vadd.f32 %v67, %v225
    %v261 = vadd.f32 %v68, %v228
    %v262 = vadd.f32 %v69, %v230
    %v263 = vadd.f32 %v70, %v233
    %v264 = vadd.f32 %v71, %v235
    %v265 = vadd.f32 %v72, %v238
    %v266 = vadd.f32 %v73, %v240
    %v267 = vadd.f32 %v74, %v243
    %v268 = vadd.f32 %v75, %v245
    %v269 = vadd.f32 %v76, %v248
    %v270 = vadd.f32 %v77, %v250
    %v271 = vadd.f32 %v78, %v253
    %v272 = vadd.f32 %v79, %v255
    %273 = vst [vmem:[#allocation2] sm:$0xff] %v257
    %274 = vst [vmem:[#allocation2 + $0x8] sm:$0xff] %v258
    %275 = vst [vmem:[#allocation2 + $0x10] sm:$0xff] %v259
    %276 = vst [vmem:[#allocation2 + $0x18] sm:$0xff] %v260
    %277 = vst [vmem:[#allocation2 + $0x20] sm:$0xff] %v261
    %278 = vst [vmem:[#allocation2 + $0x28] sm:$0xff] %v262
    %279 = vst [vmem:[#allocation2 + $0x30] sm:$0xff] %v263
    %280 = vst [vmem:[#allocation2 + $0x38] sm:$0xff] %v264
    %281 = vst [vmem:[#allocation2 + $0x40] sm:$0xff] %v265
    %282 = vst [vmem:[#allocation2 + $0x48] sm:$0xff] %v266
    %283 = vst [vmem:[#allocation2 + $0x50] sm:$0xff] %v267
    %284 = vst [vmem:[#allocation2 + $0x58] sm:$0xff] %v268
    %285 = vst [vmem:[#allocation2 + $0x60] sm:$0xff] %v269
    %286 = vst [vmem:[#allocation2 + $0x68] sm:$0xff] %v270
    %287 = vst [vmem:[#allocation2 + $0x70] sm:$0xff] %v271
    %288 = vst [vmem:[#allocation2 + $0x78] sm:$0xff] %v272
    // Predicated region
    $region22: #{tpu_custom_call.1} parent=1 // pred_check
      %p289 = pneg %p44
    $region23: #{tpu_custom_call.1} parent=1 // pred_check_branch
      %291 = sbr.rel (%p289) target = $region25
    $region24: #{tpu_custom_call.1} parent=1 // pred_region
      %v292 = vld [vmem:[#allocation2] sm:$0xff]
      %v293 = vld [vmem:[#allocation2 + $0x8] sm:$0xff]
      %v294 = vld [vmem:[#allocation2 + $0x10] sm:$0xff]
      %v295 = vld [vmem:[#allocation2 + $0x18] sm:$0xff]
      %v296 = vld [vmem:[#allocation2 + $0x20] sm:$0xff]
      %v297 = vld [vmem:[#allocation2 + $0x28] sm:$0xff]
      %v298 = vld [vmem:[#allocation2 + $0x30] sm:$0xff]
      %v299 = vld [vmem:[#allocation2 + $0x38] sm:$0xff]
      %v300 = vld [vmem:[#allocation2 + $0x40] sm:$0xff]
      %v301 = vld [vmem:[#allocation2 + $0x48] sm:$0xff]
      %v302 = vld [vmem:[#allocation2 + $0x50] sm:$0xff]
      %v303 = vld [vmem:[#allocation2 + $0x58] sm:$0xff]
      %v304 = vld [vmem:[#allocation2 + $0x60] sm:$0xff]
      %v305 = vld [vmem:[#allocation2 + $0x68] sm:$0xff]
      %v306 = vld [vmem:[#allocation2 + $0x70] sm:$0xff]
      %v307 = vld [vmem:[#allocation2 + $0x78] sm:$0xff]
      %v308 = vpack.c.bf16 %v292, %v292
      %v309 = vpack.c.bf16 %v293, %v293
      %v310 = vpack.c.bf16 %v294, %v294
      %v311 = vpack.c.bf16 %v295, %v295
      %v312 = vpack.c.bf16 %v296, %v296
      %v313 = vpack.c.bf16 %v297, %v297
      %v314 = vpack.c.bf16 %v298, %v298
      %v315 = vpack.c.bf16 %v299, %v299
      %v316 = vpack.c.bf16 %v300, %v300
      %v317 = vpack.c.bf16 %v301, %v301
      %v318 = vpack.c.bf16 %v302, %v302
      %v319 = vpack.c.bf16 %v303, %v303
      %v320 = vpack.c.bf16 %v304, %v304
      %v321 = vpack.c.bf16 %v305, %v305
      %v322 = vpack.c.bf16 %v306, %v306
      %v323 = vpack.c.bf16 %v307, %v307
      %324 = vst [vmem:[#allocation8] sm:$0xf] %v308
      %325 = vst [vmem:[#allocation8 + $0x4] sm:$0xf] %v309
      %326 = vst [vmem:[#allocation8 + $0x8] sm:$0xf] %v310
      %327 = vst [vmem:[#allocation8 + $0xc] sm:$0xf] %v311
      %328 = vst [vmem:[#allocation8 + $0x10] sm:$0xf] %v312
      %329 = vst [vmem:[#allocation8 + $0x14] sm:$0xf] %v313
      %330 = vst [vmem:[#allocation8 + $0x18] sm:$0xf] %v314
      %331 = vst [vmem:[#allocation8 + $0x1c] sm:$0xf] %v315
      %332 = vst [vmem:[#allocation8 + $0x20] sm:$0xf] %v316
      %333 = vst [vmem:[#allocation8 + $0x24] sm:$0xf] %v317
      %334 = vst [vmem:[#allocation8 + $0x28] sm:$0xf] %v318
      %335 = vst [vmem:[#allocation8 + $0x2c] sm:$0xf] %v319
      %336 = vst [vmem:[#allocation8 + $0x30] sm:$0xf] %v320
      %337 = vst [vmem:[#allocation8 + $0x34] sm:$0xf] %v321
      %338 = vst [vmem:[#allocation8 + $0x38] sm:$0xf] %v322
      %339 = vst [vmem:[#allocation8 + $0x3c] sm:$0xf] %v323
    $region25: #{tpu_custom_call.1} parent=1 // pred_fallthru
      _
    // Predicated region
    $region26: #{tpu_custom_call.1} parent=1 // pred_check
      _
    $region27: #{tpu_custom_call.1} parent=1 // pred_check_branch
      %341 = sbr.rel (0) target = $region29
    $region28: #{tpu_custom_call.1} parent=1 // pred_region
      %343 = vsyncadd [#allocation5], 0
      %s344 = sshll.u32 [#allocation8], 4
      %s345 = int_to_ptr.vmem [resolvable:$true] %s344
      %s346 = sshll.u32 %s2, 4
      %s347 = int_to_ptr.hbm [resolvable:$true] %s346
      %352 = dma.vmem_to_hbm [thread:$0]  %s345, 1024, %s347, [#allocation5], 64, 64, 4
    $region29: #{tpu_custom_call.1} parent=1 // pred_fallthru
      _
    // Predicated region
    $region30: #{tpu_custom_call.1} parent=1 // pred_check
      _
    $region31: #{tpu_custom_call.1} parent=1 // pred_check_branch
      %354 = sbr.rel (0) target = $region33
    $region32: #{tpu_custom_call.1} parent=1 // pred_region
      %356 = dma.done [#allocation5], 1024
    $region33: #{tpu_custom_call.1} parent=1 // pred_fallthru
      _
    %357 = vsyncpa [#allocation4], 1
    %358 = vsyncpa [#allocation7], 1
    %359 = vsyncpa [#allocation5], 1

</llo_original>
